<compile_context>
chip_gen: v7x
topology: tpu7x:2x2x1
jax: 0.10.0
libtpu: 0.0.40
codegen_flags: <defaults>
</compile_context>

<pallas_src>
import functools

import jax
import jax.numpy as jnp
import numpy as np
from jax.experimental import pallas as pl
from jax.experimental.pallas import tpu as pltpu


def _fused_conv_bn_relu_kernel(x_ref, w_ref, b_ref, gamma_ref, beta_ref,
                               out_ref, *, NB, HW, eps):
    """Fused depth-collapsing Conv3d (im2col) + BatchNorm2d(train) + ReLU.

    x_ref:     (Kp, NB*HW) bf16   im2col slab, NB batch elems stacked on lanes
    w_ref:     (C_out, Kp) bf16   folded conv weight (9 taps x D x C_in)
    b_ref:     (C_out, 1)  f32    conv bias
    gamma_ref: (1, C_out, 1) f32  BN weight
    beta_ref:  (1, C_out, 1) f32  BN bias
    out_ref:   (N, C_out, HW) f32 resident across the whole grid; holds raw
               conv+bias output until the last step, then BN+ReLU in place.
    """
    g = pl.program_id(0)

    # Single MXU contraction covers all 9 spatial taps * depth * C_in.
    y = jnp.dot(w_ref[...], x_ref[...],
                preferred_element_type=jnp.float32) + b_ref[...]  # (C_out, NB*HW)

    # Stash raw conv+bias output into the VMEM-resident output block; already
    # in NCHW order with HW flat on lanes -> lane-dense, unmasked stores.
    for nb in range(NB):                                           # static unroll
        out_ref[g * NB + nb] = y[:, nb * HW:(nb + 1) * HW]

    # Last step: whole batch is resident in VMEM -> batch stats + BN + ReLU.
    @pl.when(g == pl.num_programs(0) - 1)
    def _():
        y_all = out_ref[...]                                       # (N, C_out, HW)
        cnt = jnp.float32(y_all.shape[0] * HW)
        # Two-pass (centered) statistics: cheap here and avoids the
        # E[y^2] - E[y]^2 cancellation flagged in review.
        mean = jnp.sum(jnp.sum(y_all, axis=2, keepdims=True),
                       axis=0, keepdims=True) / cnt                # (1, C_out, 1)
        d = y_all - mean
        var = jnp.sum(jnp.sum(d * d, axis=2, keepdims=True),
                      axis=0, keepdims=True) / cnt                 # biased, like BN
        inv_std = jax.lax.rsqrt(var + jnp.float32(eps))
        scale = gamma_ref[...] * inv_std
        shift = beta_ref[...] - mean * scale
        out_ref[...] = jnp.maximum(y_all * scale + shift, jnp.float32(0.0))


def input_3d_slab(x, conv_w, conv_b, bn_gamma, bn_beta, eps=1e-5):
    """x: (N, C_in, D, H, W) float32 (PyTorch NCDHW). Returns (N, C_out, H, W)."""
    N, C_in, D, H, W = x.shape
    C_out, _, KD, KH, KW = conv_w.shape
    assert KD == D, "depth kernel must consume the whole slab (output depth == 1)"
    assert KH == 3 and KW == 3

    DC = D * C_in
    HW = H * W
    K0 = KH * KW * DC
    Kp = ((K0 + 15) // 16) * 16            # pad contraction dim to bf16 sublane tile

    # ---- one-time im2col re-layout in the wrapper (input is tiny) ----
    #   (N, C_in, D, H, W) -> (N, D*C_in, H, W) -> spatial zero-pad -> 9 taps
    #   stacked on the contraction axis -> (Kp, N*HW) bf16, batch on lanes.
    x_dc = jnp.transpose(x, (0, 2, 1, 3, 4)).reshape(N, DC, H, W)
    xp = jnp.pad(x_dc, ((0, 0), (0, 0), (1, 1), (1, 1)))
    taps = [xp[:, :, kh:kh + H, kw:kw + W] for kh in range(3) for kw in range(3)]
    xcol = jnp.stack(taps, axis=1).reshape(N, K0, HW)
    xcol = jnp.pad(xcol, ((0, 0), (0, Kp - K0), (0, 0)))
    xcol = jnp.transpose(xcol, (1, 0, 2)).reshape(Kp, N * HW).astype(jnp.bfloat16)

    # conv weight (O, I, D, KH, KW) -> (C_out, Kp) with K index
    #   ((kh*3+kw)*D + d)*C_in + i, matching the im2col slab above.
    w_fold = jnp.transpose(conv_w, (0, 3, 4, 2, 1)).reshape(C_out, K0)
    w_fold = jnp.pad(w_fold, ((0, 0), (0, Kp - K0))).astype(jnp.bfloat16)

    b_k = conv_b.reshape(C_out, 1).astype(jnp.float32)
    gamma_k = bn_gamma.reshape(1, C_out, 1).astype(jnp.float32)
    beta_k = bn_beta.reshape(1, C_out, 1).astype(jnp.float32)

    # Batch-block size: largest divisor of N keeping the dot's lane width
    # reasonable (whole batch per step at these test sizes -> grid of 1).
    NB = 1
    for cand in range(1, N + 1):
        if N % cand == 0 and cand * HW <= 4096:
            NB = cand
    G = N // NB

    kernel = functools.partial(_fused_conv_bn_relu_kernel, NB=NB, HW=HW, eps=eps)

    # VMEM budget from actual blocks: double-buffered bf16 inputs + resident
    # f32 output block, with headroom.
    vmem_bytes = (2 * Kp * NB * HW * 2          # x block, double buffered
                  + 2 * C_out * Kp * 2          # folded weights
                  + N * C_out * HW * 4          # resident output block
                  + 8 * C_out * 4               # bias / gamma / beta
                  + (1 << 20))                  # slack
    vmem_limit = int(max(2 * vmem_bytes, 8 * 1024 * 1024))

    out = pl.pallas_call(
        kernel,
        grid=(G,),
        in_specs=[
            pl.BlockSpec((Kp, NB * HW), lambda g: (0, g)),
            pl.BlockSpec((C_out, Kp), lambda g: (0, 0)),
            pl.BlockSpec((C_out, 1), lambda g: (0, 0)),
            pl.BlockSpec((1, C_out, 1), lambda g: (0, 0, 0)),
            pl.BlockSpec((1, C_out, 1), lambda g: (0, 0, 0)),
        ],
        out_specs=pl.BlockSpec((N, C_out, HW), lambda g: (0, 0, 0)),
        out_shape=jax.ShapeDtypeStruct((N, C_out, HW), jnp.float32),
        compiler_params=pltpu.CompilerParams(
            dimension_semantics=("arbitrary",),   # resident output + batch stats
            vmem_limit_bytes=vmem_limit),
    )(xcol, w_fold, b_k, gamma_k, beta_k)

    # Already in NCHW order with HW flattened -> free reshape, no transpose.
    return out.reshape(N, C_out, H, W)


def _reference(x, conv_w, conv_b, gamma, beta, eps=1e-5):
    """Pure-JAX reference matching the PyTorch module in training mode."""
    y = jax.lax.conv_general_dilated(
        x, conv_w, window_strides=(1, 1, 1),
        padding=((0, 0), (1, 1), (1, 1)),
        dimension_numbers=("NCDHW", "OIDHW", "NCDHW"))
    y = y + conv_b[None, :, None, None, None]
    y = jnp.squeeze(y, axis=2)                                 # (N, C_out, H, W)
    mean = jnp.mean(y, axis=(0, 2, 3), keepdims=True)
    var = jnp.var(y, axis=(0, 2, 3), keepdims=True)            # biased, like BN
    yn = (y - mean) * jax.lax.rsqrt(var + eps)
    yn = yn * gamma[None, :, None, None] + beta[None, :, None, None]
    return jnp.maximum(yn, 0.0)


if __name__ == "__main__":
    key = jax.random.PRNGKey(0)
    k1, k2, k3, k4, k5 = jax.random.split(key, 5)

    # Small shapes consistent with the module: depth D equals the depth kernel
    # so Conv3d(padding=(0,1,1)) produces depth 1, which squeeze removes.
    N, C_in, C_out, D, H, W = 2, 4, 8, 3, 16, 16
    KD, KH, KW = 3, 3, 3                                       # kernel_size=(3,3,3)

    x = jax.random.normal(k1, (N, C_in, D, H, W), jnp.float32)
    conv_w = 0.1 * jax.random.normal(k2, (C_out, C_in, KD, KH, KW), jnp.float32)
    conv_b = 0.1 * jax.random.normal(k3, (C_out,), jnp.float32)
    bn_gamma = 1.0 + 0.1 * jax.random.normal(k4, (C_out,), jnp.float32)
    bn_beta = 0.1 * jax.random.normal(k5, (C_out,), jnp.float32)

    out = input_3d_slab(x, conv_w, conv_b, bn_gamma, bn_beta)
    out = jax.block_until_ready(out)

    ref = _reference(x, conv_w, conv_b, bn_gamma, bn_beta)
    assert out.shape == (N, C_out, H, W)
    # Loose tolerance: bf16 MXU operands vs. f32 XLA conv reference.
    np.testing.assert_allclose(np.asarray(out), np.asarray(ref), atol=2e-2, rtol=2e-2)

    print("KERNEL_OK")
</pallas_src>

<mosaic_0001>
module attributes {stable_mosaic.version = 11 : i64} {
  func.func @_fused_conv_bn_relu_kernel(%arg0: i32, %arg1: memref<112x512xbf16, #tpu.memory_space<vmem>>, %arg2: memref<8x112xbf16, #tpu.memory_space<vmem>>, %arg3: memref<8x1xf32, #tpu.memory_space<vmem>>, %arg4: memref<1x8x1xf32, #tpu.memory_space<vmem>>, %arg5: memref<1x8x1xf32, #tpu.memory_space<vmem>>, %arg6: memref<2x8x256xf32, #tpu.memory_space<vmem>>) attributes {dimension_semantics = [#tpu.dimension_semantics<arbitrary>], iteration_bounds = array<i64: 1>, scalar_prefetch = 0 : i64, scratch_operands = 0 : i64, tpu.core_type = #tpu.core_type<tc>, window_params = [{transform_indices = @transform_0, window_bounds = array<i64: 112, 512>}, {pipeline_mode = #tpu.pipeline_mode<synchronous>, transform_indices = @transform_1, window_bounds = array<i64: 8, 112>}, {pipeline_mode = #tpu.pipeline_mode<synchronous>, transform_indices = @transform_2, window_bounds = array<i64: 8, 1>}, {pipeline_mode = #tpu.pipeline_mode<synchronous>, transform_indices = @transform_3, window_bounds = array<i64: 1, 8, 1>}, {pipeline_mode = #tpu.pipeline_mode<synchronous>, transform_indices = @transform_4, window_bounds = array<i64: 1, 8, 1>}, {pipeline_mode = #tpu.pipeline_mode<synchronous>, transform_indices = @transform_5, window_bounds = array<i64: 2, 8, 256>}]} {
    %c0 = arith.constant 0 : index
    %c0_0 = arith.constant 0 : index
    %0 = vector.load %arg2[%c0, %c0_0] : memref<8x112xbf16, #tpu.memory_space<vmem>>, vector<8x112xbf16>
    %c0_1 = arith.constant 0 : index
    %c0_2 = arith.constant 0 : index
    %1 = vector.load %arg1[%c0_1, %c0_2] : memref<112x512xbf16, #tpu.memory_space<vmem>>, vector<112x512xbf16>
    %cst = arith.constant dense<0.000000e+00> : vector<8x512xf32>
    %2 = tpu.matmul %0, %1, %cst {dimension_numbers = #tpu.dot_dimension_numbers<[1], [0], [0], [1], [0, 0, 1, 1], [], []>} : vector<8x112xbf16>, vector<112x512xbf16>, vector<8x512xf32> -> vector<8x512xf32>
    %c0_3 = arith.constant 0 : index
    %c0_4 = arith.constant 0 : index
    %3 = vector.load %arg3[%c0_3, %c0_4] : memref<8x1xf32, #tpu.memory_space<vmem>>, vector<8x1xf32>
    %4 = vector.broadcast %3 : vector<8x1xf32> to vector<8x512xf32>
    %5 = arith.addf %2, %4 : vector<8x512xf32>
    %6 = vector.extract_strided_slice %5 {offsets = [0, 0], sizes = [8, 256], strides = [1, 1]} : vector<8x512xf32> to vector<8x256xf32>
    %c2_i32 = arith.constant 2 : i32
    %7 = arith.muli %arg0, %c2_i32 : i32
    %c0_i32 = arith.constant 0 : i32
    %8 = arith.addi %7, %c0_i32 : i32
    %9 = arith.index_cast %8 : i32 to index
    %c0_5 = arith.constant 0 : index
    %c0_6 = arith.constant 0 : index
    %10 = vector.load %arg6[%9, %c0_5, %c0_6] : memref<2x8x256xf32, #tpu.memory_space<vmem>>, vector<1x8x256xf32>
    %11 = vector.shape_cast %10 : vector<1x8x256xf32> to vector<8x256xf32>
    %12 = vector.shape_cast %6 : vector<8x256xf32> to vector<1x8x256xf32>
    tpu.vector_store %arg6[%9, %c0_5, %c0_6], %12 {strides = array<i32>} : memref<2x8x256xf32, #tpu.memory_space<vmem>>, vector<1x8x256xf32>,
    %13 = vector.extract_strided_slice %5 {offsets = [0, 256], sizes = [8, 256], strides = [1, 1]} : vector<8x512xf32> to vector<8x256xf32>
    %c2_i32_7 = arith.constant 2 : i32
    %14 = arith.muli %arg0, %c2_i32_7 : i32
    %c1_i32 = arith.constant 1 : i32
    %15 = arith.addi %14, %c1_i32 : i32
    %16 = arith.index_cast %15 : i32 to index
    %c0_8 = arith.constant 0 : index
    %c0_9 = arith.constant 0 : index
    %17 = vector.load %arg6[%16, %c0_8, %c0_9] : memref<2x8x256xf32, #tpu.memory_space<vmem>>, vector<1x8x256xf32>
    %18 = vector.shape_cast %17 : vector<1x8x256xf32> to vector<8x256xf32>
    %19 = vector.shape_cast %13 : vector<8x256xf32> to vector<1x8x256xf32>
    tpu.vector_store %arg6[%16, %c0_8, %c0_9], %19 {strides = array<i32>} : memref<2x8x256xf32, #tpu.memory_space<vmem>>, vector<1x8x256xf32>,
    %c0_i32_10 = arith.constant 0 : i32
    %20 = arith.cmpi eq, %arg0, %c0_i32_10 : i32
    %21 = arith.extui %20 : i1 to i32
    %c0_i32_11 = arith.constant 0 : i32
    %22 = arith.cmpi ne, %21, %c0_i32_11 : i32
    scf.if %22 {
      %c0_12 = arith.constant 0 : index
      %c0_13 = arith.constant 0 : index
      %c0_14 = arith.constant 0 : index
      %23 = vector.load %arg6[%c0_12, %c0_13, %c0_14] : memref<2x8x256xf32, #tpu.memory_space<vmem>>, vector<2x8x256xf32>
      %cst_15 = arith.constant dense<0.000000e+00> : vector<2x8xf32>
      %24 = vector.multi_reduction <add>, %23, %cst_15 [2] : vector<2x8x256xf32> to vector<2x8xf32>
      %25 = vector.shape_cast %24 : vector<2x8xf32> to vector<2x8x1xf32>
      %cst_16 = arith.constant dense<0.000000e+00> : vector<8x1xf32>
      %26 = vector.multi_reduction <add>, %25, %cst_16 [0] : vector<2x8x1xf32> to vector<8x1xf32>
      %27 = vector.shape_cast %26 : vector<8x1xf32> to vector<1x8x1xf32>
      %cst_17 = arith.constant 5.120000e+02 : f32
      %28 = vector.broadcast %cst_17 : f32 to vector<1x8x1xf32>
      %29 = arith.divf %27, %28 : vector<1x8x1xf32>
      %30 = vector.broadcast %29 : vector<1x8x1xf32> to vector<2x8x256xf32>
      %31 = arith.subf %23, %30 : vector<2x8x256xf32>
      %32 = arith.mulf %31, %31 : vector<2x8x256xf32>
      %cst_18 = arith.constant dense<0.000000e+00> : vector<2x8xf32>
      %33 = vector.multi_reduction <add>, %32, %cst_18 [2] : vector<2x8x256xf32> to vector<2x8xf32>
      %34 = vector.shape_cast %33 : vector<2x8xf32> to vector<2x8x1xf32>
      %cst_19 = arith.constant dense<0.000000e+00> : vector<8x1xf32>
      %35 = vector.multi_reduction <add>, %34, %cst_19 [0] : vector<2x8x1xf32> to vector<8x1xf32>
      %36 = vector.shape_cast %35 : vector<8x1xf32> to vector<1x8x1xf32>
      %cst_20 = arith.constant 5.120000e+02 : f32
      %37 = vector.broadcast %cst_20 : f32 to vector<1x8x1xf32>
      %38 = arith.divf %36, %37 : vector<1x8x1xf32>
      %cst_21 = arith.constant 9.99999974E-6 : f32
      %39 = vector.broadcast %cst_21 : f32 to vector<1x8x1xf32>
      %40 = arith.addf %38, %39 : vector<1x8x1xf32>
      %41 = math.rsqrt %40 : vector<1x8x1xf32>
      %c0_22 = arith.constant 0 : index
      %c0_23 = arith.constant 0 : index
      %c0_24 = arith.constant 0 : index
      %42 = vector.load %arg4[%c0_22, %c0_23, %c0_24] : memref<1x8x1xf32, #tpu.memory_space<vmem>>, vector<1x8x1xf32>
      %43 = arith.mulf %42, %41 : vector<1x8x1xf32>
      %c0_25 = arith.constant 0 : index
      %c0_26 = arith.constant 0 : index
      %c0_27 = arith.constant 0 : index
      %44 = vector.load %arg5[%c0_25, %c0_26, %c0_27] : memref<1x8x1xf32, #tpu.memory_space<vmem>>, vector<1x8x1xf32>
      %45 = arith.mulf %29, %43 : vector<1x8x1xf32>
      %46 = arith.subf %44, %45 : vector<1x8x1xf32>
      %47 = vector.broadcast %43 : vector<1x8x1xf32> to vector<2x8x256xf32>
      %48 = arith.mulf %23, %47 : vector<2x8x256xf32>
      %49 = vector.broadcast %46 : vector<1x8x1xf32> to vector<2x8x256xf32>
      %50 = arith.addf %48, %49 : vector<2x8x256xf32>
      %cst_28 = arith.constant 0.000000e+00 : f32
      %51 = vector.broadcast %cst_28 : f32 to vector<2x8x256xf32>
      %52 = arith.maximumf %50, %51 : vector<2x8x256xf32>
      %c0_29 = arith.constant 0 : index
      %c0_30 = arith.constant 0 : index
      %c0_31 = arith.constant 0 : index
      %53 = vector.load %arg6[%c0_29, %c0_30, %c0_31] : memref<2x8x256xf32, #tpu.memory_space<vmem>>, vector<2x8x256xf32>
      tpu.vector_store %arg6[%c0_29, %c0_30, %c0_31], %52 {strides = array<i32>} : memref<2x8x256xf32, #tpu.memory_space<vmem>>, vector<2x8x256xf32>,
    } else {
    }
    return
  }
  func.func @transform_0(%arg0: i32) -> (i32, i32) {
    %c0_i32 = arith.constant 0 : i32
    %c0_i32_0 = arith.constant 0 : i32
    return %c0_i32, %arg0 : i32, i32
  }
  func.func @transform_1(%arg0: i32) -> (i32, i32) {
    %c0_i32 = arith.constant 0 : i32
    %c0_i32_0 = arith.constant 0 : i32
    %c0_i32_1 = arith.constant 0 : i32
    return %c0_i32, %c0_i32_0 : i32, i32
  }
  func.func @transform_2(%arg0: i32) -> (i32, i32) {
    %c0_i32 = arith.constant 0 : i32
    %c0_i32_0 = arith.constant 0 : i32
    %c0_i32_1 = arith.constant 0 : i32
    return %c0_i32, %c0_i32_0 : i32, i32
  }
  func.func @transform_3(%arg0: i32) -> (i32, i32, i32) {
    %c0_i32 = arith.constant 0 : i32
    %c0_i32_0 = arith.constant 0 : i32
    %c0_i32_1 = arith.constant 0 : i32
    %c0_i32_2 = arith.constant 0 : i32
    return %c0_i32, %c0_i32_0, %c0_i32_1 : i32, i32, i32
  }
  func.func @transform_4(%arg0: i32) -> (i32, i32, i32) {
    %c0_i32 = arith.constant 0 : i32
    %c0_i32_0 = arith.constant 0 : i32
    %c0_i32_1 = arith.constant 0 : i32
    %c0_i32_2 = arith.constant 0 : i32
    return %c0_i32, %c0_i32_0, %c0_i32_1 : i32, i32, i32
  }
  func.func @transform_5(%arg0: i32) -> (i32, i32, i32) {
    %c0_i32 = arith.constant 0 : i32
    %c0_i32_0 = arith.constant 0 : i32
    %c0_i32_1 = arith.constant 0 : i32
    %c0_i32_2 = arith.constant 0 : i32
    return %c0_i32, %c0_i32_0, %c0_i32_1 : i32, i32, i32
  }
}

</mosaic_0001>

<llo_original>
// kernel: tpu_custom_call.1
$region0: #{tpu_custom_call.1}
  #allocation0 [shape = 'u32[]', space=smem, size = 0x4, offset = 0x4, fixed_abs, tag = 'smem constant byte address 0x4 - core index']
  #allocation1 [shape = 'u32[144,128]{1,0:T(1,128)}', space=vmem, size = 0x12000, scoped, tag = 'internal scratch']
  %s0 = inlined_call_operand.hbm [shape: bf16[112,512], index: 0, kind: input, shape index: {}]
  %s1 = inlined_call_operand.vmem [shape: bf16[8,112], index: 1, kind: input, shape index: {}]
  %s2 = inlined_call_operand.vmem [shape: f32[8,1], index: 2, kind: input, shape index: {}]
  %s3 = inlined_call_operand.vmem [shape: f32[1,8,1], index: 3, kind: input, shape index: {}]
  %s4 = inlined_call_operand.vmem [shape: f32[1,8,1], index: 4, kind: input, shape index: {}]
  %s5 = inlined_call_operand.hbm [shape: f32[2,8,256], index: 5, kind: output, shape index: {}]
  %s6 = sld [smem:[#allocation0]]
  $region38: #{tpu_custom_call.1} parent=0
    _
  %s8 = ssub.s32 1, %s6
  %s9 = scalar_select 0, %s8, %s6
  $region1: #{tpu_custom_call.1} parent=0
    #allocation2 [shape = 'u8[114688]{0}', space=vmem, size = 0x1c000, scoped, tag = 'input window, operand 0, single buffered']
    #allocation3 [shape = 's32[1]{0}', space=sflag, size = 0x4, scoped, tag = 'scoped memory for tpu_custom_call.1']
    #allocation4 [shape = 's32[1]{0}', space=sflag, size = 0x4, scoped, tag = 'scoped memory for tpu_custom_call.1']
    #allocation5 [shape = 'u8[16384]{0}', space=vmem, size = 0x4000, scoped, tag = 'output window, operand 0, single buffered']
    %10 = vsyncpa [#allocation3], 0
    %11 = vsyncpa [#allocation4], 0
    // Predicated region
    $region2: #{tpu_custom_call.1} parent=1 // pred_check
      _
    $region3: #{tpu_custom_call.1} parent=1 // pred_check_branch
      %13 = sbr.rel (0) target = $region5
    $region4: #{tpu_custom_call.1} parent=1 // pred_region
      %s15 = ssub.s32 3584, 3584
      %16 = vsyncadd [#allocation3], %s15
      %s17 = sshll.u32 [#allocation2], 4
      %s18 = int_to_ptr.vmem [resolvable:$true] %s17
      %23 = dma.hbm_to_vmem [thread:$0]  %s0, 3584, %s18, [#allocation3], 256, 256, 16
    $region5: #{tpu_custom_call.1} parent=1 // pred_fallthru
      _
    // Predicated region
    $region6: #{tpu_custom_call.1} parent=1 // pred_check
      _
    $region7: #{tpu_custom_call.1} parent=1 // pred_check_branch
      %25 = sbr.rel (0) target = $region9
    $region8: #{tpu_custom_call.1} parent=1 // pred_region
      _
    $region9: #{tpu_custom_call.1} parent=1 // pred_fallthru
      _
    // Predicated region
    $region10: #{tpu_custom_call.1} parent=1 // pred_check
      _
    $region11: #{tpu_custom_call.1} parent=1 // pred_check_branch
      %27 = sbr.rel (0) target = $region13
    $region12: #{tpu_custom_call.1} parent=1 // pred_region
      _
    $region13: #{tpu_custom_call.1} parent=1 // pred_fallthru
      _
    // Predicated region
    $region14: #{tpu_custom_call.1} parent=1 // pred_check
      _
    $region15: #{tpu_custom_call.1} parent=1 // pred_check_branch
      %29 = sbr.rel (0) target = $region17
    $region16: #{tpu_custom_call.1} parent=1 // pred_region
      _
    $region17: #{tpu_custom_call.1} parent=1 // pred_fallthru
      _
    // Predicated region
    $region18: #{tpu_custom_call.1} parent=1 // pred_check
      _
    $region19: #{tpu_custom_call.1} parent=1 // pred_check_branch
      %31 = sbr.rel (0) target = $region21
    $region20: #{tpu_custom_call.1} parent=1 // pred_region
      _
    $region21: #{tpu_custom_call.1} parent=1 // pred_fallthru
      _
    // Predicated region
    $region22: #{tpu_custom_call.1} parent=1 // pred_check
      _
    $region23: #{tpu_custom_call.1} parent=1 // pred_check_branch
      %33 = sbr.rel (0) target = $region25
    $region24: #{tpu_custom_call.1} parent=1 // pred_region
      %34 = dma.done [#allocation3], 3584
    $region25: #{tpu_custom_call.1} parent=1 // pred_fallthru
      _
    %v36 = vld [vmem:[%s1] sm:$0xf]
    %v37 = vld [vmem:[#allocation2] sm:$0xff]
    %v38 = vld [vmem:[#allocation2 + $0x8] sm:$0xff]
    %v39 = vld [vmem:[#allocation2 + $0x10] sm:$0xff]
    %v40 = vld [vmem:[#allocation2 + $0x18] sm:$0xff]
    %v41 = vld [vmem:[#allocation2 + $0x20] sm:$0xff]
    %v42 = vld [vmem:[#allocation2 + $0x28] sm:$0xff]
    %v43 = vld [vmem:[#allocation2 + $0x30] sm:$0xff]
    %v44 = vld [vmem:[#allocation2 + $0x38] sm:$0xff]
    %v45 = vld [vmem:[#allocation2 + $0x40] sm:$0xff]
    %v46 = vld [vmem:[#allocation2 + $0x48] sm:$0xff]
    %v47 = vld [vmem:[#allocation2 + $0x50] sm:$0xff]
    %v48 = vld [vmem:[#allocation2 + $0x58] sm:$0xff]
    %v49 = vld [vmem:[#allocation2 + $0x60] sm:$0xff]
    %v50 = vld [vmem:[#allocation2 + $0x68] sm:$0xff]
    %v51 = vld [vmem:[#allocation2 + $0x70] sm:$0xff]
    %v52 = vld [vmem:[#allocation2 + $0x78] sm:$0xff]
    %v53 = vld [vmem:[#allocation2 + $0x80] sm:$0xff]
    %v54 = vld [vmem:[#allocation2 + $0x88] sm:$0xff]
    %v55 = vld [vmem:[#allocation2 + $0x90] sm:$0xff]
    %v56 = vld [vmem:[#allocation2 + $0x98] sm:$0xff]
    %v57 = vld [vmem:[#allocation2 + $0xa0] sm:$0xff]
    %v58 = vld [vmem:[#allocation2 + $0xa8] sm:$0xff]
    %v59 = vld [vmem:[#allocation2 + $0xb0] sm:$0xff]
    %v60 = vld [vmem:[#allocation2 + $0xb8] sm:$0xff]
    %v61 = vld [vmem:[#allocation2 + $0xc0] sm:$0xff]
    %v62 = vld [vmem:[#allocation2 + $0xc8] sm:$0xff]
    %v63 = vld [vmem:[#allocation2 + $0xd0] sm:$0xff]
    %v64 = vld [vmem:[#allocation2 + $0xd8] sm:$0xff]
    %v65 = vld [vmem:[%s2] sm:$0xff]
    %67 = vset.pattern.permute.xlu0 0
    %68 = vperm.xlu0 %67, %v65
    %v69 = vpop.permute.xlu0 %68
    %v99 = vunpack.c.l.b16 %v37
    %v100 = vunpack.c.h.b16 %v37
    %v101 = vunpack.c.l.b16 %v38
    %v102 = vunpack.c.h.b16 %v38
    %v103 = vunpack.c.l.b16 %v39
    %v104 = vunpack.c.h.b16 %v39
    %v105 = vunpack.c.l.b16 %v40
    %v106 = vunpack.c.h.b16 %v40
    %v107 = vunpack.c.l.b16 %v41
    %v108 = vunpack.c.h.b16 %v41
    %v109 = vunpack.c.l.b16 %v42
    %v110 = vunpack.c.h.b16 %v42
    %v111 = vunpack.c.l.b16 %v43
    %v112 = vunpack.c.h.b16 %v43
    %v113 = vunpack.c.l.b16 %v44
    %v114 = vunpack.c.h.b16 %v44
    %v115 = vunpack.c.l.b16 %v45
    %v116 = vunpack.c.h.b16 %v45
    %v117 = vunpack.c.l.b16 %v46
    %v118 = vunpack.c.h.b16 %v46
    %v119 = vunpack.c.l.b16 %v47
    %v120 = vunpack.c.h.b16 %v47
    %v121 = vunpack.c.l.b16 %v48
    %v122 = vunpack.c.h.b16 %v48
    %v123 = vunpack.c.l.b16 %v49
    %v124 = vunpack.c.h.b16 %v49
    %v125 = vunpack.c.l.b16 %v50
    %v126 = vunpack.c.h.b16 %v50
    %v127 = vunpack.c.l.b16 %v51
    %v128 = vunpack.c.h.b16 %v51
    %v129 = vunpack.c.l.b16 %v52
    %v130 = vunpack.c.h.b16 %v52
    %v131 = vunpack.c.l.b16 %v53
    %v132 = vunpack.c.h.b16 %v53
    %v133 = vunpack.c.l.b16 %v54
    %v134 = vunpack.c.h.b16 %v54
    %v135 = vunpack.c.l.b16 %v55
    %v136 = vunpack.c.h.b16 %v55
    %v137 = vunpack.c.l.b16 %v56
    %v138 = vunpack.c.h.b16 %v56
    %v139 = vunpack.c.l.b16 %v57
    %v140 = vunpack.c.h.b16 %v57
    %v141 = vunpack.c.l.b16 %v58
    %v142 = vunpack.c.h.b16 %v58
    %v143 = vunpack.c.l.b16 %v59
    %v144 = vunpack.c.h.b16 %v59
    %v145 = vunpack.c.l.b16 %v60
    %v146 = vunpack.c.h.b16 %v60
    %v147 = vunpack.c.l.b16 %v61
    %v148 = vunpack.c.h.b16 %v61
    %v149 = vunpack.c.l.b16 %v62
    %v150 = vunpack.c.h.b16 %v62
    %v151 = vunpack.c.l.b16 %v63
    %v152 = vunpack.c.h.b16 %v63
    %v153 = vunpack.c.l.b16 %v64
    %v154 = vunpack.c.h.b16 %v64
    %v155 = vpack.c.b16 %v103, %v99
    %v156 = vpack.c.b16 %v104, %v100
    %v157 = vpack.c.b16 %v105, %v101
    %v158 = vpack.c.b16 %v106, %v102
    %v159 = vpack.c.b16 %v111, %v107
    %v160 = vpack.c.b16 %v112, %v108
    %v161 = vpack.c.b16 %v113, %v109
    %v162 = vpack.c.b16 %v114, %v110
    %v163 = vpack.c.b16 %v119, %v115
    %v164 = vpack.c.b16 %v120, %v116
    %v165 = vpack.c.b16 %v121, %v117
    %v166 = vpack.c.b16 %v122, %v118
    %v167 = vpack.c.b16 %v127, %v123
    %v168 = vpack.c.b16 %v128, %v124
    %v169 = vpack.c.b16 %v129, %v125
    %v170 = vpack.c.b16 %v130, %v126
    %v171 = vpack.c.b16 %v135, %v131
    %v172 = vpack.c.b16 %v136, %v132
    %v173 = vpack.c.b16 %v137, %v133
    %v174 = vpack.c.b16 %v138, %v134
    %v175 = vpack.c.b16 %v143, %v139
    %v176 = vpack.c.b16 %v144, %v140
    %v177 = vpack.c.b16 %v145, %v141
    %v178 = vpack.c.b16 %v146, %v142
    %v179 = vpack.c.b16 %v151, %v147
    %v180 = vpack.c.b16 %v152, %v148
    %v181 = vpack.c.b16 %v153, %v149
    %v182 = vpack.c.b16 %v154, %v150
    %vm211 = vcmask 916480
    %v213 = vsel %vm211, %v36, 0
    %215 = vmatprep.subr.bf16.mxu0 %v156
    %216 = vmatpush1.bf16.msra.mxu0 %v155
    %217 = vmatprep.subr.bf16.mxu0 %v160
    %218 = vmatpush1.bf16.msra.mxu0 %v159
    %219 = vmatprep.subr.bf16.mxu0 %v164
    %220 = vmatpush1.bf16.msra.mxu0 %v163
    %221 = vmatprep.subr.bf16.mxu0 %v168
    %222 = vmatpush1.bf16.msra.mxu0 %v167
    %223 = vmatprep.subr.bf16.mxu0 %v172
    %224 = vmatpush1.bf16.msra.mxu0 %v171
    %225 = vmatprep.subr.bf16.mxu0 %v176
    %226 = vmatpush1.bf16.msra.mxu0 %v175
    %227 = vmatprep.subr.bf16.mxu0 %v180
    %228 = vmatpush1.bf16.msra.mxu0 %v179
    %229 = vmatprep.subr.bf16.mxu0 0
    %230 = vmatpush1.bf16.msra.mxu0 0
    %231 = vmatprep.subr.bf16.mxu0 0
    %232 = vmatpush1.bf16.msra.mxu0 0
    %233 = vmatprep.subr.bf16.mxu0 0
    %234 = vmatpush1.bf16.msra.mxu0 0
    %235 = vmatprep.subr.bf16.mxu0 0
    %236 = vmatpush1.bf16.msra.mxu0 0
    %237 = vmatprep.subr.bf16.mxu0 0
    %238 = vmatpush1.bf16.msra.mxu0 0
    %239 = vmatprep.subr.bf16.mxu0 0
    %240 = vmatpush1.bf16.msra.mxu0 0
    %241 = vmatprep.subr.bf16.mxu0 0
    %242 = vmatpush1.bf16.msra.mxu0 0
    %243 = vmatprep.subr.bf16.mxu0 0
    %244 = vmatpush1.bf16.msra.mxu0 0
    %245 = vmatprep.subr.bf16.mxu0 0
    %246 = vmatpush1.bf16.msra.mxu0 0
    %247 = vmatprep.mubr.bf16.mxu0 0
    %248 = vmatmul.mubr.bf16.gmra.mrb[0].mxu0 %v213
    %v249 = vpop.f32.mrb[0].mxu0
    %v250 = vadd.f32 %v69, %v249
    %v251 = vpop.f32.mrb[0].mxu0
    %v252 = vadd.f32 %v69, %v251
    %v253 = vpop.f32.mrb[0].mxu0
    %v254 = vpop.f32.mrb[0].mxu0
    %255 = vdwg.mxu0
    %256 = vmatprep.subr.bf16.mxu0 %v158
    %257 = vmatpush1.bf16.msra.mxu0 %v157
    %258 = vmatprep.subr.bf16.mxu0 %v162
    %259 = vmatpush1.bf16.msra.mxu0 %v161
    %260 = vmatprep.subr.bf16.mxu0 %v166
    %261 = vmatpush1.bf16.msra.mxu0 %v165
    %262 = vmatprep.subr.bf16.mxu0 %v170
    %263 = vmatpush1.bf16.msra.mxu0 %v169
    %264 = vmatprep.subr.bf16.mxu0 %v174
    %265 = vmatpush1.bf16.msra.mxu0 %v173
    %266 = vmatprep.subr.bf16.mxu0 %v178
    %267 = vmatpush1.bf16.msra.mxu0 %v177
    %268 = vmatprep.subr.bf16.mxu0 %v182
    %269 = vmatpush1.bf16.msra.mxu0 %v181
    %270 = vmatprep.subr.bf16.mxu0 0
    %271 = vmatpush1.bf16.msra.mxu0 0
    %272 = vmatprep.subr.bf16.mxu0 0
    %273 = vmatpush1.bf16.msra.mxu0 0
    %274 = vmatprep.subr.bf16.mxu0 0
    %275 = vmatpush1.bf16.msra.mxu0 0
    %276 = vmatprep.subr.bf16.mxu0 0
    %277 = vmatpush1.bf16.msra.mxu0 0
    %278 = vmatprep.subr.bf16.mxu0 0
    %279 = vmatpush1.bf16.msra.mxu0 0
    %280 = vmatprep.subr.bf16.mxu0 0
    %281 = vmatpush1.bf16.msra.mxu0 0
    %282 = vmatprep.subr.bf16.mxu0 0
    %283 = vmatpush1.bf16.msra.mxu0 0
    %284 = vmatprep.subr.bf16.mxu0 0
    %285 = vmatpush1.bf16.msra.mxu0 0
    %286 = vmatprep.subr.bf16.mxu0 0
    %287 = vmatpush1.bf16.msra.mxu0 0
    %288 = vmatprep.mubr.bf16.mxu0 0
    %289 = vmatmul.mubr.bf16.gmra.mrb[0].mxu0 %v213
    %v290 = vpop.f32.mrb[0].mxu0
    %v291 = vadd.f32 %v69, %v290
    %v292 = vpop.f32.mrb[0].mxu0
    %v293 = vadd.f32 %v69, %v292
    %v294 = vpop.f32.mrb[0].mxu0
    %v295 = vpop.f32.mrb[0].mxu0
    %296 = vdwg.mxu0
    %s297 = smul.u32 0, 2
    %s298 = smul.u32 %s297, 2
    %s299 = smul.addr %s298, 8
    %s300 = scalar_lea.vmem [#allocation5], %s299
    %301 = vst [vmem:[%s300] sm:$0xff] %v250
    %302 = vst [vmem:[%s300 + $0x8] sm:$0xff] %v252
    %s303 = sadd.s32 %s297, 1
    %s304 = smul.u32 %s303, 2
    %s305 = smul.addr %s304, 8
    %s306 = scalar_lea.vmem [#allocation5], %s305
    %307 = vst [vmem:[%s306] sm:$0xff] %v291
    %308 = vst [vmem:[%s306 + $0x8] sm:$0xff] %v293
    %p309 = scmp.eq.s32.totalorder 0, 0
    // Predicated region
    $region26: #{tpu_custom_call.1} parent=1 // pred_check
      %p310 = pneg %p309
    $region27: #{tpu_custom_call.1} parent=1 // pred_check_branch
      %312 = sbr.rel (%p310) target = $region29
    $region28: #{tpu_custom_call.1} parent=1 // pred_region
      %v313 = vld [vmem:[#allocation5] sm:$0xff]
      %v314 = vld [vmem:[#allocation5 + $0x8] sm:$0xff]
      %v315 = vld [vmem:[#allocation5 + $0x10] sm:$0xff]
      %v316 = vld [vmem:[#allocation5 + $0x18] sm:$0xff]
      %v317 = vadd.f32 %v313, %v314
      %318 = vadd.xlane.f32.xlu0 %v317
      %v319 = vpop.xlane.xlu0 %318
      %v320 = vadd.f32 %v315, %v316
      %321 = vadd.xlane.f32.xlu0 %v320
      %v322 = vpop.xlane.xlu0 %321
      %v323 = vadd.f32 %v319, %v322
      %v324 = vrcp.pop 512.0
      %v325 = vmul.f32 %v323, %v324
      %v326 = vsub.f32 %v313, %v325
      %v327 = vsub.f32 %v314, %v325
      %v328 = vsub.f32 %v315, %v325
      %v329 = vsub.f32 %v316, %v325
      %v330 = vmul.f32 %v326, %v326
      %v331 = vmul.f32 %v327, %v327
      %v332 = vmul.f32 %v328, %v328
      %v333 = vmul.f32 %v329, %v329
      %v334 = vadd.f32 %v330, %v331
      %335 = vadd.xlane.f32.xlu0 %v334
      %v336 = vpop.xlane.xlu0 %335
      %v337 = vadd.f32 %v332, %v333
      %338 = vadd.xlane.f32.xlu0 %v337
      %v339 = vpop.xlane.xlu0 %338
      %v340 = vadd.f32 %v336, %v339
      %v341 = vmul.f32 %v340, %v324
      %v342 = vadd.f32 %v341, 1e-05
      %v343 = vrsqrt.pop %v342
      %v344 = vld [vmem:[%s3] sm:$0xff]
      %v345 = vmul.f32 %v344, %v343
      %v346 = vld [vmem:[%s4] sm:$0xff]
      %v347 = vmul.f32 %v325, %v345
      %v348 = vsub.f32 %v346, %v347
      %350 = vset.pattern.permute.xlu0 0
      %351 = vperm.xlu0 %350, %v345
      %v352 = vpop.permute.xlu0 %351
      %v354 = vmul.f32 %v313, %v352
      %v355 = vmul.f32 %v314, %v352
      %v356 = vmul.f32 %v315, %v352
      %v357 = vmul.f32 %v316, %v352
      %359 = vset.pattern.permute.xlu0 0
      %360 = vperm.xlu0 %359, %v348
      %v361 = vpop.permute.xlu0 %360
      %v363 = vadd.f32 %v354, %v361
      %v364 = vadd.f32 %v355, %v361
      %v365 = vadd.f32 %v356, %v361
      %v366 = vadd.f32 %v357, %v361
      %v367 = vmax.f32 %v363, 0.0
      %v368 = vmax.f32 %v364, 0.0
      %v369 = vmax.f32 %v365, 0.0
      %v370 = vmax.f32 %v366, 0.0
      %371 = vst [vmem:[#allocation5] sm:$0xff] %v367
      %372 = vst [vmem:[#allocation5 + $0x8] sm:$0xff] %v368
      %373 = vst [vmem:[#allocation5 + $0x10] sm:$0xff] %v369
      %374 = vst [vmem:[#allocation5 + $0x18] sm:$0xff] %v370
    $region29: #{tpu_custom_call.1} parent=1 // pred_fallthru
      _
    // Predicated region
    $region30: #{tpu_custom_call.1} parent=1 // pred_check
      _
    $region31: #{tpu_custom_call.1} parent=1 // pred_check_branch
      %376 = sbr.rel (0) target = $region33
    $region32: #{tpu_custom_call.1} parent=1 // pred_region
      %s378 = ssub.s32 512, 512
      %379 = vsyncadd [#allocation4], %s378
      %s380 = sshll.u32 [#allocation5], 4
      %s381 = int_to_ptr.vmem [resolvable:$true] %s380
      %386 = dma.vmem_to_hbm [thread:$0]  %s381, 512, %s5, [#allocation4], 256, 256, 16
    $region33: #{tpu_custom_call.1} parent=1 // pred_fallthru
      _
    // Predicated region
    $region34: #{tpu_custom_call.1} parent=1 // pred_check
      _
    $region35: #{tpu_custom_call.1} parent=1 // pred_check_branch
      %388 = sbr.rel (0) target = $region37
    $region36: #{tpu_custom_call.1} parent=1 // pred_region
      %389 = dma.done [#allocation4], 512
    $region37: #{tpu_custom_call.1} parent=1 // pred_fallthru
      _
    %390 = vsyncpa [#allocation3], 1
    %391 = vsyncpa [#allocation4], 1

</llo_original>
